<compile_context>
chip_gen: v6e
topology: v6e:2x2x1
jax: 0.10.0
libtpu: 0.0.40
codegen_flags: <defaults>
</compile_context>

<pallas_src>
import functools

import jax
import jax.numpy as jnp
from jax.experimental import pallas as pl
from jax.experimental.pallas import tpu as pltpu

_LANES = 128
_TARGET_BLOCK_BYTES = 4 * 1024 * 1024  # ~4 MiB per input block per grid step


def _relu6_add_clamp_kernel(x1_ref, x2_ref, o_ref, *, min_val, max_val):
    # ReLU6 on both inputs (VPU elementwise; hidden under the streaming DMA).
    r1 = jnp.clip(x1_ref[...], 0.0, 6.0)
    r2 = jnp.clip(x2_ref[...], 0.0, 6.0)
    v = r1 + r2
    # clamp_min then clamp_max (sequential, matches torch semantics incl. NaN).
    v = jnp.maximum(v, jnp.asarray(min_val, v.dtype))
    v = jnp.minimum(v, jnp.asarray(max_val, v.dtype))
    o_ref[...] = v


def _round_up(x, m):
    return ((x + m - 1) // m) * m


def relu6_add_clamp(x1, x2, min_val=2.0, max_val=1.0):
    assert x1.shape == x2.shape and x1.dtype == x2.dtype
    orig_shape = x1.shape
    dtype = x1.dtype
    itemsize = jnp.dtype(dtype).itemsize

    n = x1.size
    needs_pad = (n % _LANES) != 0
    rows = pl.cdiv(n, _LANES)
    padded = rows * _LANES

    # Byte-targeted tile so every dtype moves ~4 MiB of each input per step.
    target_rows = max(8, _TARGET_BLOCK_BYTES // (_LANES * itemsize))
    target_rows = _round_up(target_rows, 8)
    # Keep >=2 grid steps when possible so a "parallel" grid axis can shard
    # across both v7x TensorCores; round the half-split up to a sublane tile.
    half_rows = _round_up(pl.cdiv(rows, 2), 8)
    row_tile = max(8, min(target_rows, half_rows))

    grid_steps = pl.cdiv(rows, row_tile)  # partial trailing block handled by Pallas

    def to_slab(x):
        flat = jnp.reshape(x, (-1,))
        if needs_pad:
            # TODO(synk): <=127-element pad + output slice; only hit when
            # numel % 128 != 0 (extra HBM pass avoided in the common case).
            flat = jnp.pad(flat, (0, padded - n))
        return jnp.reshape(flat, (rows, _LANES))

    x1s, x2s = to_slab(x1), to_slab(x2)

    kernel = functools.partial(
        _relu6_add_clamp_kernel, min_val=min_val, max_val=max_val
    )

    # Advisory cost: 2 reads + 1 write of the slab, ~5 VPU ops / element.
    cost = pl.CostEstimate(
        flops=5 * padded,
        transcendentals=0,
        bytes_accessed=3 * padded * itemsize,
    )

    out = pl.pallas_call(
        kernel,
        out_shape=jax.ShapeDtypeStruct((rows, _LANES), dtype),
        grid_spec=pltpu.PrefetchScalarGridSpec(
            num_scalar_prefetch=0,
            grid=(grid_steps,),
            in_specs=[
                pl.BlockSpec((row_tile, _LANES), lambda i: (i, 0)),
                pl.BlockSpec((row_tile, _LANES), lambda i: (i, 0)),
            ],
            out_specs=pl.BlockSpec((row_tile, _LANES), lambda i: (i, 0)),
        ),
        compiler_params=pltpu.CompilerParams(
            dimension_semantics=("parallel",),
            # 3 arrays x 2 pipeline buffers x 4 MiB = 24 MiB; v5e's scoped-VMEM
            # default is only 16 MiB, so raise the limit explicitly.
            vmem_limit_bytes=32 * 1024 * 1024,
        ),
        cost_estimate=cost,
    )(x1s, x2s)

    flat_out = jnp.reshape(out, (-1,))
    if needs_pad:
        flat_out = flat_out[:n]
    return jnp.reshape(flat_out, orig_shape)


def _reference(x1, x2, min_val, max_val):
    v = jnp.clip(x1, 0.0, 6.0) + jnp.clip(x2, 0.0, 6.0)
    return jnp.minimum(jnp.maximum(v, min_val), max_val)


if __name__ == "__main__":
    key = jax.random.PRNGKey(0)
    k1, k2, k3, k4 = jax.random.split(key, 4)

    # Small 4-D shape consistent with the module's elementwise forward
    # (divisible-by-128 fast path: free reshape, no padding).
    x1 = jax.random.normal(k1, (2, 4, 16, 16), dtype=jnp.float32)
    x2 = jax.random.normal(k2, (2, 4, 16, 16), dtype=jnp.float32)
    out = relu6_add_clamp(x1, x2, min_val=2.0, max_val=1.0)
    jax.block_until_ready(out)
    ref = _reference(x1, x2, 2.0, 1.0)
    assert jnp.allclose(out, ref, atol=1e-6), "mismatch vs reference (aligned)"

    # Non-128-divisible size to exercise the (rare) pad/slice path.
    y1 = jax.random.normal(k3, (1, 5, 9, 9), dtype=jnp.float32)
    y2 = jax.random.normal(k4, (1, 5, 9, 9), dtype=jnp.float32)
    out2 = relu6_add_clamp(y1, y2, min_val=2.0, max_val=1.0)
    jax.block_until_ready(out2)
    ref2 = _reference(y1, y2, 2.0, 1.0)
    assert jnp.allclose(out2, ref2, atol=1e-6), "mismatch vs reference (ragged)"

    print("KERNEL_OK")
</pallas_src>

<mosaic_0001>
module attributes {stable_mosaic.version = 11 : i64} {
  func.func @_relu6_add_clamp_kernel(%arg0: i32, %arg1: memref<8x128xf32, #tpu.memory_space<vmem>>, %arg2: memref<8x128xf32, #tpu.memory_space<vmem>>, %arg3: memref<8x128xf32, #tpu.memory_space<vmem>>) attributes {dimension_semantics = [#tpu.dimension_semantics<parallel>], iteration_bounds = array<i64: 2>, scalar_prefetch = 0 : i64, scratch_operands = 0 : i64, tpu.core_type = #tpu.core_type<tc>, window_params = [{transform_indices = @transform_0, window_bounds = array<i64: 8, 128>}, {transform_indices = @transform_1, window_bounds = array<i64: 8, 128>}, {transform_indices = @transform_2, window_bounds = array<i64: 8, 128>}]} {
    %c0 = arith.constant 0 : index
    %c0_0 = arith.constant 0 : index
    %0 = vector.load %arg1[%c0, %c0_0] : memref<8x128xf32, #tpu.memory_space<vmem>>, vector<8x128xf32>
    %cst = arith.constant 0.000000e+00 : f32
    %cst_1 = arith.constant 6.000000e+00 : f32
    %1 = vector.broadcast %cst : f32 to vector<8x128xf32>
    %2 = arith.maximumf %1, %0 : vector<8x128xf32>
    %3 = vector.broadcast %cst_1 : f32 to vector<8x128xf32>
    %4 = arith.minimumf %3, %2 : vector<8x128xf32>
    %c0_2 = arith.constant 0 : index
    %c0_3 = arith.constant 0 : index
    %5 = vector.load %arg2[%c0_2, %c0_3] : memref<8x128xf32, #tpu.memory_space<vmem>>, vector<8x128xf32>
    %cst_4 = arith.constant 0.000000e+00 : f32
    %cst_5 = arith.constant 6.000000e+00 : f32
    %6 = vector.broadcast %cst_4 : f32 to vector<8x128xf32>
    %7 = arith.maximumf %6, %5 : vector<8x128xf32>
    %8 = vector.broadcast %cst_5 : f32 to vector<8x128xf32>
    %9 = arith.minimumf %8, %7 : vector<8x128xf32>
    %10 = arith.addf %4, %9 : vector<8x128xf32>
    %cst_6 = arith.constant 2.000000e+00 : f32
    %11 = vector.broadcast %cst_6 : f32 to vector<8x128xf32>
    %12 = arith.maximumf %10, %11 : vector<8x128xf32>
    %cst_7 = arith.constant 1.000000e+00 : f32
    %13 = vector.broadcast %cst_7 : f32 to vector<8x128xf32>
    %14 = arith.minimumf %12, %13 : vector<8x128xf32>
    %c0_8 = arith.constant 0 : index
    %c0_9 = arith.constant 0 : index
    %15 = vector.load %arg3[%c0_8, %c0_9] : memref<8x128xf32, #tpu.memory_space<vmem>>, vector<8x128xf32>
    tpu.vector_store %arg3[%c0_8, %c0_9], %14 {strides = array<i32>} : memref<8x128xf32, #tpu.memory_space<vmem>>, vector<8x128xf32>,
    return
  }
  func.func @transform_0(%arg0: i32) -> (i32, i32) {
    %c0_i32 = arith.constant 0 : i32
    %c0_i32_0 = arith.constant 0 : i32
    return %arg0, %c0_i32 : i32, i32
  }
  func.func @transform_1(%arg0: i32) -> (i32, i32) {
    %c0_i32 = arith.constant 0 : i32
    %c0_i32_0 = arith.constant 0 : i32
    return %arg0, %c0_i32 : i32, i32
  }
  func.func @transform_2(%arg0: i32) -> (i32, i32) {
    %c0_i32 = arith.constant 0 : i32
    %c0_i32_0 = arith.constant 0 : i32
    return %arg0, %c0_i32 : i32, i32
  }
}

</mosaic_0001>

<llo_original>
// kernel: tpu_custom_call.1
$region0: #{tpu_custom_call.1}
  #allocation0 [shape = 'u32[]', space=smem, size = 0x4, offset = 0x4, fixed_abs, tag = 'smem constant byte address 0x4 - core index']
  #allocation1 [shape = 'u32[144,128]{1,0:T(1,128)}', space=vmem, size = 0x12000, scoped, tag = 'internal scratch']
  %s0 = inlined_call_operand.hbm [shape: f32[16,128], index: 0, kind: input, shape index: {}]
  %s1 = inlined_call_operand.hbm [shape: f32[16,128], index: 1, kind: input, shape index: {}]
  %s2 = inlined_call_operand.hbm [shape: f32[16,128], index: 2, kind: output, shape index: {}]
  %s3 = sld [smem:[#allocation0]]
  $region49: #{tpu_custom_call.1} parent=0
    _
  %s5 = ssub.s32 1, %s3
  %s6 = scalar_select 0, %s5, %s3
  $region1: #{tpu_custom_call.1} parent=0
    #allocation2 [shape = 'u8[8192]{0}', space=vmem, size = 0x2000, scoped, tag = 'input window, operand 0']
    #allocation3 [shape = 's32[2]{0}', space=sflag, size = 0x8, scoped, tag = 'scoped memory for tpu_custom_call.1']
    #allocation4 [shape = 's32[2]{0}', space=sflag, size = 0x8, scoped, tag = 'scoped memory for tpu_custom_call.1']
    #allocation5 [shape = 'u8[8192]{0}', space=vmem, size = 0x2000, scoped, tag = 'input window, operand 1']
    #allocation6 [shape = 's32[2]{0}', space=sflag, size = 0x8, scoped, tag = 'scoped memory for tpu_custom_call.1']
    #allocation7 [shape = 'u8[8192]{0}', space=vmem, size = 0x2000, scoped, tag = 'output window, operand 0']
    %7 = vsyncpa [#allocation3], 0
    %s8 = scalar_lea.sflag [#allocation3], 1
    %9 = vsyncpa %s8, 0
    %10 = vsyncpa [#allocation6], 0
    %s11 = scalar_lea.sflag [#allocation6], 1
    %12 = vsyncpa %s11, 0
    %13 = vsyncpa [#allocation4], 0
    %s14 = scalar_lea.sflag [#allocation4], 1
    %15 = vsyncpa %s14, 0
    loop: start=0, step=1, limit=4
    $region2: #{tpu_custom_call.1} parent=1 // loop_pre_header
      _
    $region3: #{tpu_custom_call.1} parent=1 // loop_header
      %s17 = sphi 0, %s21
      %p18 = scmp.ge.s32.totalorder %s17, 4
      %s27 = sphi 0, %s29
      %s30 = sphi 0, %s27
      %s31 = sphi 0, %s30
      %s47 = sphi 0, %s31
      %s53 = sphi 0, %s55
      %s56 = sphi 0, %s53
      %s57 = sphi 0, %s56
      %s73 = sphi 0, %s57
      %s79 = sphi 0, %s81
      %s82 = sphi 0, %s79
      %s83 = sphi 0, %s82
      %s99 = sphi 0, %s83
    $region4: #{tpu_custom_call.1} parent=1 // loop_header_branch
      %20 = sbr.rel (%p18) target = $region8
    $region5: #{tpu_custom_call.1} parent=1 // loop_body
      %s22 = ssub.s32 %s17, 1
      %s23 = ssub.s32 %s17, 2
      %s24 = sadd.s32 %s17, 1
      %s25 = ssub.s32 %s17, %s24
      %p26 = scmp.eq.s32.totalorder %s25, 0
      %s28 = sadd.s32 %s27, 1
      %s29 = scalar_select %p26, %s27, %s28
      %p32 = pneg %p26
      %p33 = scmp.eq.s32.totalorder %s17, 1
      %p34 = por %p32, %p33
      %p35 = scmp.ne.s32.totalorder %s27, %s30
      %p36 = scmp.eq.s32.totalorder %s17, 0
      %p37 = por %p35, %p36
      %p38 = scmp.ne.s32.totalorder %s27, %s30
      %p39 = scmp.eq.s32.totalorder %s22, 1
      %p40 = por %p38, %p39
      %p41 = scmp.ne.s32.totalorder %s30, %s31
      %p42 = scmp.eq.s32.totalorder %s22, 0
      %p43 = por %p41, %p42
      %p44 = scmp.ne.s32.totalorder %s30, %s31
      %p45 = scmp.eq.s32.totalorder %s23, 1
      %p46 = por %p44, %p45
      %p48 = scmp.ne.s32.totalorder %s31, %s47
      %p49 = scmp.eq.s32.totalorder %s23, 0
      %p50 = por %p48, %p49
      %s51 = ssub.s32 %s17, %s24
      %p52 = scmp.eq.s32.totalorder %s51, 0
      %s54 = sadd.s32 %s53, 1
      %s55 = scalar_select %p52, %s53, %s54
      %p58 = pneg %p52
      %p59 = scmp.eq.s32.totalorder %s17, 1
      %p60 = por %p58, %p59
      %p61 = scmp.ne.s32.totalorder %s53, %s56
      %p62 = scmp.eq.s32.totalorder %s17, 0
      %p63 = por %p61, %p62
      %p64 = scmp.ne.s32.totalorder %s53, %s56
      %p65 = scmp.eq.s32.totalorder %s22, 1
      %p66 = por %p64, %p65
      %p67 = scmp.ne.s32.totalorder %s56, %s57
      %p68 = scmp.eq.s32.totalorder %s22, 0
      %p69 = por %p67, %p68
      %p70 = scmp.ne.s32.totalorder %s56, %s57
      %p71 = scmp.eq.s32.totalorder %s23, 1
      %p72 = por %p70, %p71
      %p74 = scmp.ne.s32.totalorder %s57, %s73
      %p75 = scmp.eq.s32.totalorder %s23, 0
      %p76 = por %p74, %p75
      %s77 = ssub.s32 %s17, %s24
      %p78 = scmp.eq.s32.totalorder %s77, 0
      %s80 = sadd.s32 %s79, 1
      %s81 = scalar_select %p78, %s79, %s80
      %p84 = pneg %p78
      %p85 = scmp.eq.s32.totalorder %s17, 1
      %p86 = por %p84, %p85
      %p87 = scmp.ne.s32.totalorder %s79, %s82
      %p88 = scmp.eq.s32.totalorder %s17, 0
      %p89 = por %p87, %p88
      %p90 = scmp.ne.s32.totalorder %s79, %s82
      %p91 = scmp.eq.s32.totalorder %s22, 1
      %p92 = por %p90, %p91
      %p93 = scmp.ne.s32.totalorder %s82, %s83
      %p94 = scmp.eq.s32.totalorder %s22, 0
      %p95 = por %p93, %p94
      %p96 = scmp.ne.s32.totalorder %s82, %s83
      %p97 = scmp.eq.s32.totalorder %s23, 1
      %p98 = por %p96, %p97
      %p100 = scmp.ne.s32.totalorder %s83, %s99
      %p101 = scmp.eq.s32.totalorder %s23, 0
      %p102 = por %p100, %p101
      %p103 = scmp.le.s32.totalorder 1, %s17
      %p104 = scmp.lt.s32.totalorder %s17, 3
      %p105 = pnand %p103, %p104
      %p106 = pneg %p105
      // Predicated region
      $region9: #{tpu_custom_call.1} parent=5 // pred_check
        _
      $region10: #{tpu_custom_call.1} parent=5 // pred_check_branch
        %108 = sbr.rel (%p105) target = $region12
      $region11: #{tpu_custom_call.1} parent=5 // pred_region
        %s109 = ssub.s32 %s17, 1
      $region12: #{tpu_custom_call.1} parent=5 // pred_fallthru
        _
      %p110 = scmp.lt.s32.totalorder %s17, 2
      // Predicated region
      $region13: #{tpu_custom_call.1} parent=5 // pred_check
        %p111 = pneg %p110
      $region14: #{tpu_custom_call.1} parent=5 // pred_check_branch
        %113 = sbr.rel (%p111) target = $region16
      $region15: #{tpu_custom_call.1} parent=5 // pred_region
        // Predicated region
        $region17: #{tpu_custom_call.1} parent=15 // pred_check
          %p114 = pneg %p37
        $region18: #{tpu_custom_call.1} parent=15 // pred_check_branch
          %116 = sbr.rel (%p114) target = $region20
        $region19: #{tpu_custom_call.1} parent=15 // pred_region
          %s117 = sand.u32 %s27, 1
          %s118 = scalar_lea.sflag [#allocation3], %s117
          %s119 = sand.u32 %s27, 1
          %s120 = smul.addr %s119, 8
          %s121 = scalar_lea.vmem [#allocation2], %s120
          %s123 = ssub.s32 128, 128
          %124 = vsyncadd %s118, %s123
          %s125 = smul.addr %s17, 128
          %s126 = scalar_lea.hbm %s0, %s125
          %s128 = sshll.u32 %s121, 4
          %s129 = int_to_ptr.vmem [resolvable:$true] %s128
          %131 = dma.hbm_to_vmem [thread:$0]  %s126, 128, %s129, %s118
        $region20: #{tpu_custom_call.1} parent=15 // pred_fallthru
          _
        // Predicated region
        $region21: #{tpu_custom_call.1} parent=15 // pred_check
          %p132 = pneg %p63
        $region22: #{tpu_custom_call.1} parent=15 // pred_check_branch
          %134 = sbr.rel (%p132) target = $region24
        $region23: #{tpu_custom_call.1} parent=15 // pred_region
          %s135 = sand.u32 %s53, 1
          %s136 = scalar_lea.sflag [#allocation6], %s135
          %s137 = sand.u32 %s53, 1
          %s138 = smul.addr %s137, 8
          %s139 = scalar_lea.vmem [#allocation5], %s138
          %s141 = ssub.s32 128, 128
          %142 = vsyncadd %s136, %s141
          %s143 = smul.addr %s17, 128
          %s144 = scalar_lea.hbm %s1, %s143
          %s146 = sshll.u32 %s139, 4
          %s147 = int_to_ptr.vmem [resolvable:$true] %s146
          %149 = dma.hbm_to_vmem [thread:$0]  %s144, 128, %s147, %s136
        $region24: #{tpu_custom_call.1} parent=15 // pred_fallthru
          _
      $region16: #{tpu_custom_call.1} parent=5 // pred_fallthru
        _
      %p150 = scmp.le.s32.totalorder 1, %s17
      %p151 = scmp.lt.s32.totalorder %s17, 3
      %p152 = pnand %p150, %p151
      %p153 = pneg %p152
      // Predicated region
      $region25: #{tpu_custom_call.1} parent=5 // pred_check
        _
      $region26: #{tpu_custom_call.1} parent=5 // pred_check_branch
        %155 = sbr.rel (%p152) target = $region28
      $region27: #{tpu_custom_call.1} parent=5 // pred_region
        %s156 = ssub.s32 %s17, 1
        %s157 = sand.u32 %s30, 1
        %s158 = scalar_lea.sflag [#allocation3], %s157
        %s159 = sand.u32 %s30, 1
        %s160 = smul.addr %s159, 8
        %s161 = scalar_lea.vmem [#allocation2], %s160
        // Predicated region
        $region29: #{tpu_custom_call.1} parent=27 // pred_check
          %p162 = pneg %p43
        $region30: #{tpu_custom_call.1} parent=27 // pred_check_branch
          %164 = sbr.rel (%p162) target = $region32
        $region31: #{tpu_custom_call.1} parent=27 // pred_region
          %165 = dma.done %s158, 128
        $region32: #{tpu_custom_call.1} parent=27 // pred_fallthru
          _
        %s166 = sand.u32 %s56, 1
        %s167 = scalar_lea.sflag [#allocation6], %s166
        %s168 = sand.u32 %s56, 1
        %s169 = smul.addr %s168, 8
        %s170 = scalar_lea.vmem [#allocation5], %s169
        // Predicated region
        $region33: #{tpu_custom_call.1} parent=27 // pred_check
          %p171 = pneg %p69
        $region34: #{tpu_custom_call.1} parent=27 // pred_check_branch
          %173 = sbr.rel (%p171) target = $region36
        $region35: #{tpu_custom_call.1} parent=27 // pred_region
          %174 = dma.done %s167, 128
        $region36: #{tpu_custom_call.1} parent=27 // pred_fallthru
          _
        %s175 = sand.u32 %s30, 1
        %s176 = scalar_lea.sflag [#allocation3], %s175
        %s177 = sand.u32 %s30, 1
        %s178 = smul.addr %s177, 8
        %s179 = scalar_lea.vmem [#allocation2], %s178
        %p180 = pneg %p43
        %p181 = pneg %p40
        %s182 = sand.u32 %s56, 1
        %s183 = scalar_lea.sflag [#allocation6], %s182
        %s184 = sand.u32 %s56, 1
        %s185 = smul.addr %s184, 8
        %s186 = scalar_lea.vmem [#allocation5], %s185
        %p187 = pneg %p69
        %p188 = pneg %p66
        %p189 = pneg %p95
        %p190 = pneg %p92
        %s191 = sand.u32 %s82, 1
        %s192 = scalar_lea.sflag [#allocation4], %s191
        %s193 = sand.u32 %s82, 1
        %s194 = smul.addr %s193, 8
        %s195 = scalar_lea.vmem [#allocation7], %s194
        %v196 = vld [vmem:[%s161] sm:$0xff]
        %v197 = vmax.f32 %v196, 0.0
        %v198 = vmin.f32 %v197, 6.0
        %v199 = vld [vmem:[%s170] sm:$0xff]
        %v200 = vmax.f32 %v199, 0.0
        %v201 = vmin.f32 %v200, 6.0
        %v202 = vadd.f32 %v198, %v201
        %v203 = vmax.f32 %v202, 2.0
        %v204 = vmin.f32 %v203, 1.0
        %205 = vst [vmem:[%s195] sm:$0xff] %v204
        %s206 = sand.u32 %s82, 1
        %s207 = scalar_lea.sflag [#allocation4], %s206
        %s208 = sand.u32 %s82, 1
        %s209 = smul.addr %s208, 8
        %s210 = scalar_lea.vmem [#allocation7], %s209
        // Predicated region
        $region37: #{tpu_custom_call.1} parent=27 // pred_check
          %p211 = pneg %p92
        $region38: #{tpu_custom_call.1} parent=27 // pred_check_branch
          %213 = sbr.rel (%p211) target = $region40
        $region39: #{tpu_custom_call.1} parent=27 // pred_region
          %s215 = ssub.s32 128, 128
          %216 = vsyncadd %s207, %s215
          %s217 = smul.addr %s22, 128
          %s218 = scalar_lea.hbm %s2, %s217
          %s220 = sshll.u32 %s210, 4
          %s221 = int_to_ptr.vmem [resolvable:$true] %s220
          %223 = dma.vmem_to_hbm [thread:$0]  %s221, 128, %s218, %s207
        $region40: #{tpu_custom_call.1} parent=27 // pred_fallthru
          _
      $region28: #{tpu_custom_call.1} parent=5 // pred_fallthru
        _
      %p224 = scmp.le.s32.totalorder 2, %s17
      // Predicated region
      $region41: #{tpu_custom_call.1} parent=5 // pred_check
        %p225 = pneg %p224
      $region42: #{tpu_custom_call.1} parent=5 // pred_check_branch
        %227 = sbr.rel (%p225) target = $region44
      $region43: #{tpu_custom_call.1} parent=5 // pred_region
        %s228 = ssub.s32 %s17, 2
        // Predicated region
        $region45: #{tpu_custom_call.1} parent=43 // pred_check
          %p229 = pneg %p98
        $region46: #{tpu_custom_call.1} parent=43 // pred_check_branch
          %231 = sbr.rel (%p229) target = $region48
        $region47: #{tpu_custom_call.1} parent=43 // pred_region
          %s232 = sand.u32 %s83, 1
          %s233 = scalar_lea.sflag [#allocation4], %s232
          %s234 = sand.u32 %s83, 1
          %s235 = smul.addr %s234, 8
          %s236 = scalar_lea.vmem [#allocation7], %s235
          %237 = dma.done %s233, 128
        $region48: #{tpu_custom_call.1} parent=43 // pred_fallthru
          _
      $region44: #{tpu_custom_call.1} parent=5 // pred_fallthru
        _
    $region6: #{tpu_custom_call.1} parent=1 // loop_footer
      %s21 = sadd.s32 1, %s17
    $region7: #{tpu_custom_call.1} parent=1 // loop_footer_branch
      %16 = sbr.rel target = $region3
    $region8: #{tpu_custom_call.1} parent=1 // loop_exit
      _
    %238 = vsyncpa [#allocation3], 1
    %s239 = scalar_lea.sflag [#allocation3], 1
    %240 = vsyncpa %s239, 1
    %241 = vsyncpa [#allocation6], 1
    %s242 = scalar_lea.sflag [#allocation6], 1
    %243 = vsyncpa %s242, 1
    %244 = vsyncpa [#allocation4], 1
    %s245 = scalar_lea.sflag [#allocation4], 1
    %246 = vsyncpa %s245, 1

</llo_original>
